<compile_context>
chip_gen: v7x
topology: tpu7x:2x2x1
jax: 0.10.0
libtpu: 0.0.40
codegen_flags: <defaults>
</compile_context>

<pallas_src>
import jax
import jax.numpy as jnp
from jax.experimental import pallas as pl
from jax.experimental.pallas import tpu as pltpu


def _drop_features_kernel(x_ref, mask_ref, o_ref):
    # mask_ref is (1, F); broadcasts over the row-tile. Pure VPU multiply.
    o_ref[...] = x_ref[...] * mask_ref[...]


def _round_up(v, m):
    return -(-v // m) * m


def drop_features(x, drop_rate, key, *, training=True, row_tile=None, donate=False):
    """Pallas implementation of cogdl's dropout_features.

    x:         [N, F] array (rows = nodes, cols = features; F is lane axis).
    drop_rate: per-feature drop probability.
    key:       jax PRNG key used to sample the (1, F) feature mask.
    donate:    alias x's buffer with the output (caller must not reuse x).
    """
    if not training or float(drop_rate) <= 0.0:
        return x

    n, f = x.shape
    itemsize = jnp.dtype(x.dtype).itemsize
    sublane = {4: 8, 2: 16, 1: 32}.get(itemsize, 8)

    # Per-feature keep mask, sampled once in the wrapper
    # (matches torch.bernoulli(1 - p).view(1, -1); no 1/keep rescale).
    mask = jax.random.bernoulli(key, p=1.0 - float(drop_rate), shape=(1, f))
    mask = mask.astype(x.dtype)

    # Lane-dense layout for narrow feature dims: fold rows into the lane axis
    # (row-major reshape = zero-cost layout plumbing) so stores are full-width
    # vst instead of masked vst.msk partial stores.
    fold = 1
    if f < 128 and n > 1:
        max_fold = max(1, min(n, 1024 // max(1, f)))
        for cand in range(max_fold, 1, -1):
            if n % cand == 0:
                fold = cand
                break
    if fold > 1:
        x_in = x.reshape(n // fold, fold * f)
        mask_in = jnp.tile(mask, (1, fold))
    else:
        x_in = x
        mask_in = mask
    n2, f2 = x_in.shape

    # VMEM budget from the actual part (v5e/v6e: 128 MiB, v7x: 64 MiB per TC).
    # Cap at 64 MiB so actual usage (2 in-bufs + 2 out-bufs ~= 4x block + mask)
    # stays well under v7x's physical VMEM even if the query misreports.
    try:
        info = pltpu.get_tpu_info()
        vmem_cap = int(getattr(info, "vmem_capacity_bytes", 64 * 1024 * 1024))
    except Exception:
        vmem_cap = 64 * 1024 * 1024
    vmem_limit = min(int(vmem_cap * 0.70), 64 * 1024 * 1024)
    target_bytes = max(2 * 1024 * 1024, vmem_limit // 6)

    if row_tile is None:
        row_tile = max(sublane, (target_bytes // max(1, f2 * itemsize)) // sublane * sublane)
        # Megacore: keep >= ~4 row blocks when possible so the "parallel" grid
        # axis can be sharded across both v7x TensorCores.
        row_tile = min(row_tile, max(sublane, _round_up(pl.cdiv(n2, 4), sublane)))
    else:
        # Round user-supplied tile to the dtype sublane tile (8/16/32).
        row_tile = max(sublane, (int(row_tile) // sublane) * sublane)
    row_tile = min(row_tile, _round_up(n2, sublane))
    if row_tile > n2:
        row_tile = n2  # single block equal to the full row extent (always legal)

    grid = (pl.cdiv(n2, row_tile),)  # ragged N -> partial last block, no pad/slice

    out = pl.pallas_call(
        _drop_features_kernel,
        out_shape=jax.ShapeDtypeStruct((n2, f2), x.dtype),
        grid_spec=pl.GridSpec(
            grid=grid,
            in_specs=[
                pl.BlockSpec((row_tile, f2), lambda i: (i, 0)),
                pl.BlockSpec((1, f2), lambda i: (0, 0)),  # mask resident across grid
            ],
            out_specs=pl.BlockSpec((row_tile, f2), lambda i: (i, 0)),
        ),
        compiler_params=pltpu.CompilerParams(
            dimension_semantics=("parallel",),  # order-independent -> megacore OK
            vmem_limit_bytes=vmem_limit,
        ),
        input_output_aliases=({0: 0} if donate else {}),
    )(x_in, mask_in)

    return out.reshape(n, f) if fold > 1 else out


if __name__ == "__main__":
    key = jax.random.PRNGKey(0)
    kx, kmask = jax.random.split(key)
    drop_rate = 0.5

    # Case 1: tile-aligned shape.
    N, F = 128, 256
    x = jax.random.normal(kx, (N, F), dtype=jnp.float32)
    y = jax.block_until_ready(drop_features(x, drop_rate, kmask, training=True))
    assert y.shape == x.shape and y.dtype == x.dtype

    # Reference: identical mask computed the same way in plain JAX.
    ref_mask = jax.random.bernoulli(kmask, p=1.0 - drop_rate, shape=(1, F)).astype(x.dtype)
    assert bool(jnp.allclose(y, x * ref_mask))

    # Structural checks: every column is either identical to x or all-zero.
    col_zero = jnp.all(y == 0.0, axis=0)
    kept = jnp.where(col_zero[None, :], x, y)
    assert bool(jnp.allclose(kept, x))
    assert bool(jnp.all(jnp.logical_or(col_zero, jnp.all(y == x, axis=0))))

    # Case 2: ragged row count (partial last block; no pad / slice pass).
    x_odd = jax.random.normal(kx, (37, F), dtype=jnp.float32)
    y_odd = jax.block_until_ready(drop_features(x_odd, drop_rate, kmask, training=True))
    assert bool(jnp.allclose(y_odd, x_odd * ref_mask))

    # Case 3: narrow feature dim -> lane-dense fold path.
    Fs = 32
    x_small = jax.random.normal(kx, (120, Fs), dtype=jnp.float32)
    ref_mask_s = jax.random.bernoulli(kmask, p=1.0 - drop_rate, shape=(1, Fs)).astype(x_small.dtype)
    y_small = jax.block_until_ready(drop_features(x_small, drop_rate, kmask, training=True))
    assert y_small.shape == x_small.shape
    assert bool(jnp.allclose(y_small, x_small * ref_mask_s))

    # Eval mode is identity.
    y_eval = jax.block_until_ready(drop_features(x, drop_rate, kmask, training=False))
    assert bool(jnp.array_equal(y_eval, x))

    print("KERNEL_OK")
</pallas_src>

<mosaic_0001>
module attributes {stable_mosaic.version = 11 : i64} {
  func.func @_drop_features_kernel(%arg0: i32, %arg1: memref<32x256xf32, #tpu.memory_space<vmem>>, %arg2: memref<1x256xf32, #tpu.memory_space<vmem>>, %arg3: memref<32x256xf32, #tpu.memory_space<vmem>>) attributes {dimension_semantics = [#tpu.dimension_semantics<parallel>], iteration_bounds = array<i64: 4>, scalar_prefetch = 0 : i64, scratch_operands = 0 : i64, tpu.core_type = #tpu.core_type<tc>, window_params = [{transform_indices = @transform_0, window_bounds = array<i64: 32, 256>}, {pipeline_mode = #tpu.pipeline_mode<synchronous>, transform_indices = @transform_1, window_bounds = array<i64: 1, 256>}, {transform_indices = @transform_2, window_bounds = array<i64: 32, 256>}]} {
    %c0 = arith.constant 0 : index
    %c0_0 = arith.constant 0 : index
    %0 = vector.load %arg1[%c0, %c0_0] : memref<32x256xf32, #tpu.memory_space<vmem>>, vector<32x256xf32>
    %c0_1 = arith.constant 0 : index
    %c0_2 = arith.constant 0 : index
    %1 = vector.load %arg2[%c0_1, %c0_2] : memref<1x256xf32, #tpu.memory_space<vmem>>, vector<1x256xf32>
    %2 = vector.broadcast %1 : vector<1x256xf32> to vector<32x256xf32>
    %3 = arith.mulf %0, %2 : vector<32x256xf32>
    %c0_3 = arith.constant 0 : index
    %c0_4 = arith.constant 0 : index
    %4 = vector.load %arg3[%c0_3, %c0_4] : memref<32x256xf32, #tpu.memory_space<vmem>>, vector<32x256xf32>
    tpu.vector_store %arg3[%c0_3, %c0_4], %3 {strides = array<i32>} : memref<32x256xf32, #tpu.memory_space<vmem>>, vector<32x256xf32>,
    return
  }
  func.func @transform_0(%arg0: i32) -> (i32, i32) {
    %c0_i32 = arith.constant 0 : i32
    %c0_i32_0 = arith.constant 0 : i32
    return %arg0, %c0_i32 : i32, i32
  }
  func.func @transform_1(%arg0: i32) -> (i32, i32) {
    %c0_i32 = arith.constant 0 : i32
    %c0_i32_0 = arith.constant 0 : i32
    %c0_i32_1 = arith.constant 0 : i32
    return %c0_i32, %c0_i32_0 : i32, i32
  }
  func.func @transform_2(%arg0: i32) -> (i32, i32) {
    %c0_i32 = arith.constant 0 : i32
    %c0_i32_0 = arith.constant 0 : i32
    return %arg0, %c0_i32 : i32, i32
  }
}

</mosaic_0001>

<llo_original>
// kernel: tpu_custom_call.1
$region0: #{tpu_custom_call.1}
  #allocation0 [shape = 'u32[]', space=smem, size = 0x4, offset = 0x4, fixed_abs, tag = 'smem constant byte address 0x4 - core index']
  #allocation1 [shape = 'u32[144,128]{1,0:T(1,128)}', space=vmem, size = 0x12000, scoped, tag = 'internal scratch']
  %s0 = inlined_call_operand.hbm [shape: f32[128,256], index: 0, kind: input, shape index: {}]
  %s1 = inlined_call_operand.vmem [shape: f32[1,256], index: 1, kind: input, shape index: {}]
  %s2 = inlined_call_operand.hbm [shape: f32[128,256], index: 2, kind: output, shape index: {}]
  %s3 = sld [smem:[#allocation0]]
  $region45: #{tpu_custom_call.1} parent=0
    _
  %s5 = ssub.s32 1, %s3
  %s6 = scalar_select 0, %s5, %s3
  $region1: #{tpu_custom_call.1} parent=0
    #allocation2 [shape = 'u8[65536]{0}', space=vmem, size = 0x10000, scoped, tag = 'input window, operand 0']
    #allocation3 [shape = 's32[2]{0}', space=sflag, size = 0x8, scoped, tag = 'scoped memory for tpu_custom_call.1']
    #allocation4 [shape = 's32[2]{0}', space=sflag, size = 0x8, scoped, tag = 'scoped memory for tpu_custom_call.1']
    #allocation5 [shape = 'u8[65536]{0}', space=vmem, size = 0x10000, scoped, tag = 'output window, operand 0']
    %7 = vsyncpa [#allocation3], 0
    %s8 = scalar_lea.sflag [#allocation3], 1
    %9 = vsyncpa %s8, 0
    %10 = vsyncpa [#allocation4], 0
    %s11 = scalar_lea.sflag [#allocation4], 1
    %12 = vsyncpa %s11, 0
    loop: start=0, step=1, limit=6
    $region2: #{tpu_custom_call.1} parent=1 // loop_pre_header
      _
    $region3: #{tpu_custom_call.1} parent=1 // loop_header
      %s14 = sphi 0, %s18
      %p15 = scmp.ge.s32.totalorder %s14, 6
      %s24 = sphi 0, %s26
      %s27 = sphi 0, %s24
      %s28 = sphi 0, %s27
      %s44 = sphi 0, %s28
      %s48 = sphi 0, %s48
      %s50 = sphi 0, %s48
      %s51 = sphi 0, %s50
      %s65 = sphi 0, %s51
      %s71 = sphi 0, %s73
      %s74 = sphi 0, %s71
      %s75 = sphi 0, %s74
      %s91 = sphi 0, %s75
    $region4: #{tpu_custom_call.1} parent=1 // loop_header_branch
      %17 = sbr.rel (%p15) target = $region8
    $region5: #{tpu_custom_call.1} parent=1 // loop_body
      %s19 = ssub.s32 %s14, 1
      %s20 = ssub.s32 %s14, 2
      %s21 = sadd.s32 %s14, 1
      %s22 = ssub.s32 %s14, %s21
      %p23 = scmp.eq.s32.totalorder %s22, 0
      %s25 = sadd.s32 %s24, 1
      %s26 = scalar_select %p23, %s24, %s25
      %p29 = pneg %p23
      %p30 = scmp.eq.s32.totalorder %s14, 3
      %p31 = por %p29, %p30
      %p32 = scmp.ne.s32.totalorder %s24, %s27
      %p33 = scmp.eq.s32.totalorder %s14, 0
      %p34 = por %p32, %p33
      %p35 = scmp.ne.s32.totalorder %s24, %s27
      %p36 = scmp.eq.s32.totalorder %s19, 3
      %p37 = por %p35, %p36
      %p38 = scmp.ne.s32.totalorder %s27, %s28
      %p39 = scmp.eq.s32.totalorder %s19, 0
      %p40 = por %p38, %p39
      %p41 = scmp.ne.s32.totalorder %s27, %s28
      %p42 = scmp.eq.s32.totalorder %s20, 3
      %p43 = por %p41, %p42
      %p45 = scmp.ne.s32.totalorder %s28, %s44
      %p46 = scmp.eq.s32.totalorder %s20, 0
      %p47 = por %p45, %p46
      %s49 = sadd.s32 %s48, 1
      %p52 = scmp.eq.s32.totalorder %s14, 3
      %p53 = scmp.ne.s32.totalorder %s48, %s50
      %p54 = scmp.eq.s32.totalorder %s14, 0
      %p55 = por %p53, %p54
      %p56 = scmp.ne.s32.totalorder %s48, %s50
      %p57 = scmp.eq.s32.totalorder %s19, 3
      %p58 = por %p56, %p57
      %p59 = scmp.ne.s32.totalorder %s50, %s51
      %p60 = scmp.eq.s32.totalorder %s19, 0
      %p61 = por %p59, %p60
      %p62 = scmp.ne.s32.totalorder %s50, %s51
      %p63 = scmp.eq.s32.totalorder %s20, 3
      %p64 = por %p62, %p63
      %p66 = scmp.ne.s32.totalorder %s51, %s65
      %p67 = scmp.eq.s32.totalorder %s20, 0
      %p68 = por %p66, %p67
      %s69 = ssub.s32 %s14, %s21
      %p70 = scmp.eq.s32.totalorder %s69, 0
      %s72 = sadd.s32 %s71, 1
      %s73 = scalar_select %p70, %s71, %s72
      %p76 = pneg %p70
      %p77 = scmp.eq.s32.totalorder %s14, 3
      %p78 = por %p76, %p77
      %p79 = scmp.ne.s32.totalorder %s71, %s74
      %p80 = scmp.eq.s32.totalorder %s14, 0
      %p81 = por %p79, %p80
      %p82 = scmp.ne.s32.totalorder %s71, %s74
      %p83 = scmp.eq.s32.totalorder %s19, 3
      %p84 = por %p82, %p83
      %p85 = scmp.ne.s32.totalorder %s74, %s75
      %p86 = scmp.eq.s32.totalorder %s19, 0
      %p87 = por %p85, %p86
      %p88 = scmp.ne.s32.totalorder %s74, %s75
      %p89 = scmp.eq.s32.totalorder %s20, 3
      %p90 = por %p88, %p89
      %p92 = scmp.ne.s32.totalorder %s75, %s91
      %p93 = scmp.eq.s32.totalorder %s20, 0
      %p94 = por %p92, %p93
      %p95 = scmp.le.s32.totalorder 1, %s14
      %p96 = scmp.lt.s32.totalorder %s14, 5
      %p97 = pnand %p95, %p96
      %p98 = pneg %p97
      // Predicated region
      $region9: #{tpu_custom_call.1} parent=5 // pred_check
        _
      $region10: #{tpu_custom_call.1} parent=5 // pred_check_branch
        %100 = sbr.rel (%p97) target = $region12
      $region11: #{tpu_custom_call.1} parent=5 // pred_region
        %s101 = ssub.s32 %s14, 1
        // Predicated region
        $region13: #{tpu_custom_call.1} parent=11 // pred_check
          %p102 = pneg %p61
        $region14: #{tpu_custom_call.1} parent=11 // pred_check_branch
          %104 = sbr.rel (%p102) target = $region16
        $region15: #{tpu_custom_call.1} parent=11 // pred_region
          _
        $region16: #{tpu_custom_call.1} parent=11 // pred_fallthru
          _
      $region12: #{tpu_custom_call.1} parent=5 // pred_fallthru
        _
      %p105 = scmp.lt.s32.totalorder %s14, 4
      // Predicated region
      $region17: #{tpu_custom_call.1} parent=5 // pred_check
        %p106 = pneg %p105
      $region18: #{tpu_custom_call.1} parent=5 // pred_check_branch
        %108 = sbr.rel (%p106) target = $region20
      $region19: #{tpu_custom_call.1} parent=5 // pred_region
        // Predicated region
        $region21: #{tpu_custom_call.1} parent=19 // pred_check
          %p109 = pneg %p34
        $region22: #{tpu_custom_call.1} parent=19 // pred_check_branch
          %111 = sbr.rel (%p109) target = $region24
        $region23: #{tpu_custom_call.1} parent=19 // pred_region
          %s112 = sand.u32 %s24, 1
          %s113 = scalar_lea.sflag [#allocation3], %s112
          %s114 = sand.u32 %s24, 1
          %s115 = smul.addr %s114, 64
          %s116 = scalar_lea.vmem [#allocation2], %s115
          %s117 = smul.u32 4, %s14
          %s119 = ssub.s32 1024, 1024
          %120 = vsyncadd %s113, %s119
          %s121 = smul.addr %s117, 2
          %s122 = smul.addr %s121, 128
          %s123 = scalar_lea.hbm %s0, %s122
          %s124 = sshll.u32 %s116, 4
          %s125 = int_to_ptr.vmem [resolvable:$true] %s124
          %130 = dma.hbm_to_vmem [thread:$0]  %s123, 1024, %s125, %s113, 256, 256, 16
        $region24: #{tpu_custom_call.1} parent=19 // pred_fallthru
          _
      $region20: #{tpu_custom_call.1} parent=5 // pred_fallthru
        _
      %p131 = scmp.le.s32.totalorder 1, %s14
      %p132 = scmp.lt.s32.totalorder %s14, 5
      %p133 = pnand %p131, %p132
      %p134 = pneg %p133
      // Predicated region
      $region25: #{tpu_custom_call.1} parent=5 // pred_check
        _
      $region26: #{tpu_custom_call.1} parent=5 // pred_check_branch
        %136 = sbr.rel (%p133) target = $region28
      $region27: #{tpu_custom_call.1} parent=5 // pred_region
        %s137 = ssub.s32 %s14, 1
        %s138 = sand.u32 %s27, 1
        %s139 = scalar_lea.sflag [#allocation3], %s138
        %s140 = sand.u32 %s27, 1
        %s141 = smul.addr %s140, 64
        %s142 = scalar_lea.vmem [#allocation2], %s141
        // Predicated region
        $region29: #{tpu_custom_call.1} parent=27 // pred_check
          %p143 = pneg %p40
        $region30: #{tpu_custom_call.1} parent=27 // pred_check_branch
          %145 = sbr.rel (%p143) target = $region32
        $region31: #{tpu_custom_call.1} parent=27 // pred_region
          %146 = dma.done %s139, 1024
        $region32: #{tpu_custom_call.1} parent=27 // pred_fallthru
          _
        %s147 = sand.u32 %s27, 1
        %s148 = scalar_lea.sflag [#allocation3], %s147
        %s149 = sand.u32 %s27, 1
        %s150 = smul.addr %s149, 64
        %s151 = scalar_lea.vmem [#allocation2], %s150
        %p152 = pneg %p40
        %p153 = pneg %p37
        %p154 = pneg %p61
        %p155 = pneg %p58
        %p156 = pneg %p87
        %p157 = pneg %p84
        %s158 = sand.u32 %s74, 1
        %s159 = scalar_lea.sflag [#allocation4], %s158
        %s160 = sand.u32 %s74, 1
        %s161 = smul.addr %s160, 64
        %s162 = scalar_lea.vmem [#allocation5], %s161
        %s163 = smul.u32 4, %s19
        %s164 = smul.u32 4, %s19
        %v165 = vld [vmem:[%s142] sm:$0xff]
        %v166 = vld [vmem:[%s142 + $0x8] sm:$0xff]
        %v167 = vld [vmem:[%s142 + $0x10] sm:$0xff]
        %v168 = vld [vmem:[%s142 + $0x18] sm:$0xff]
        %v169 = vld [vmem:[%s142 + $0x20] sm:$0xff]
        %v170 = vld [vmem:[%s142 + $0x28] sm:$0xff]
        %v171 = vld [vmem:[%s142 + $0x30] sm:$0xff]
        %v172 = vld [vmem:[%s142 + $0x38] sm:$0xff]
        %v173 = vld [vmem:[%s1] sm:$0x3]
        %v175 = vlaneseq
        %v176 = vshrl.u32 %v175, 7
        %v177 = vsub.s32 0, %v176
        %v178 = vrot.slane %v173, %v177
        %v179 = vlaneseq
        %v180 = vshrl.u32 %v179, 7
        %v181 = vsub.s32 1, %v180
        %v182 = vrot.slane %v173, %v181
        %v185 = vmul.f32 %v165, %v178
        %v186 = vmul.f32 %v166, %v182
        %v187 = vmul.f32 %v167, %v178
        %v188 = vmul.f32 %v168, %v182
        %v189 = vmul.f32 %v169, %v178
        %v190 = vmul.f32 %v170, %v182
        %v191 = vmul.f32 %v171, %v178
        %v192 = vmul.f32 %v172, %v182
        %193 = vst [vmem:[%s162] sm:$0xff] %v185
        %194 = vst [vmem:[%s162 + $0x8] sm:$0xff] %v186
        %195 = vst [vmem:[%s162 + $0x10] sm:$0xff] %v187
        %196 = vst [vmem:[%s162 + $0x18] sm:$0xff] %v188
        %197 = vst [vmem:[%s162 + $0x20] sm:$0xff] %v189
        %198 = vst [vmem:[%s162 + $0x28] sm:$0xff] %v190
        %199 = vst [vmem:[%s162 + $0x30] sm:$0xff] %v191
        %200 = vst [vmem:[%s162 + $0x38] sm:$0xff] %v192
        %s201 = sand.u32 %s74, 1
        %s202 = scalar_lea.sflag [#allocation4], %s201
        %s203 = sand.u32 %s74, 1
        %s204 = smul.addr %s203, 64
        %s205 = scalar_lea.vmem [#allocation5], %s204
        // Predicated region
        $region33: #{tpu_custom_call.1} parent=27 // pred_check
          %p206 = pneg %p84
        $region34: #{tpu_custom_call.1} parent=27 // pred_check_branch
          %208 = sbr.rel (%p206) target = $region36
        $region35: #{tpu_custom_call.1} parent=27 // pred_region
          %s209 = smul.u32 4, %s19
          %s211 = ssub.s32 1024, 1024
          %212 = vsyncadd %s202, %s211
          %s213 = smul.addr %s209, 2
          %s214 = smul.addr %s213, 128
          %s215 = scalar_lea.hbm %s2, %s214
          %s216 = sshll.u32 %s205, 4
          %s217 = int_to_ptr.vmem [resolvable:$true] %s216
          %222 = dma.vmem_to_hbm [thread:$0]  %s217, 1024, %s215, %s202, 256, 256, 16
        $region36: #{tpu_custom_call.1} parent=27 // pred_fallthru
          _
      $region28: #{tpu_custom_call.1} parent=5 // pred_fallthru
        _
      %p223 = scmp.le.s32.totalorder 2, %s14
      // Predicated region
      $region37: #{tpu_custom_call.1} parent=5 // pred_check
        %p224 = pneg %p223
      $region38: #{tpu_custom_call.1} parent=5 // pred_check_branch
        %226 = sbr.rel (%p224) target = $region40
      $region39: #{tpu_custom_call.1} parent=5 // pred_region
        %s227 = ssub.s32 %s14, 2
        // Predicated region
        $region41: #{tpu_custom_call.1} parent=39 // pred_check
          %p228 = pneg %p90
        $region42: #{tpu_custom_call.1} parent=39 // pred_check_branch
          %230 = sbr.rel (%p228) target = $region44
        $region43: #{tpu_custom_call.1} parent=39 // pred_region
          %s231 = sand.u32 %s75, 1
          %s232 = scalar_lea.sflag [#allocation4], %s231
          %s233 = sand.u32 %s75, 1
          %s234 = smul.addr %s233, 64
          %s235 = scalar_lea.vmem [#allocation5], %s234
          %236 = dma.done %s232, 1024
        $region44: #{tpu_custom_call.1} parent=39 // pred_fallthru
          _
      $region40: #{tpu_custom_call.1} parent=5 // pred_fallthru
        _
    $region6: #{tpu_custom_call.1} parent=1 // loop_footer
      %s18 = sadd.s32 1, %s14
    $region7: #{tpu_custom_call.1} parent=1 // loop_footer_branch
      %13 = sbr.rel target = $region3
    $region8: #{tpu_custom_call.1} parent=1 // loop_exit
      _
    %237 = vsyncpa [#allocation3], 1
    %s238 = scalar_lea.sflag [#allocation3], 1
    %239 = vsyncpa %s238, 1
    %240 = vsyncpa [#allocation4], 1
    %s241 = scalar_lea.sflag [#allocation4], 1
    %242 = vsyncpa %s241, 1

</llo_original>
